<compile_context>
chip_gen: v7x
topology: tpu7x:2x2x1
jax: 0.10.0
libtpu: 0.0.40
codegen_flags: <defaults>
</compile_context>

<pallas_src>
import functools

import jax
import jax.numpy as jnp
from jax.experimental import pallas as pl
from jax.experimental.pallas import tpu as pltpu


def _round_up(v, m):
    return (v + m - 1) // m * m


def _linear_mask_kernel(x_ref, w_ref, keep_ref, b_ref, o_ref, acc_ref):
    k = pl.program_id(2)

    @pl.when(k == 0)
    def _():
        acc_ref[...] = jnp.zeros_like(acc_ref)

    # Zero the masked weight columns (matches torch: w_cp[:, mask] = 0 exactly,
    # including NaN/Inf weights in masked columns), then contract K with K on
    # the MXU into the f32 accumulator.
    keep = keep_ref[...] != 0                              # (1, tk) bool
    w = jnp.where(keep, w_ref[...], jnp.zeros_like(w_ref[...]))  # (tn, tk)
    acc_ref[...] += jax.lax.dot_general(
        x_ref[...], w,
        dimension_numbers=(((1,), (1,)), ((), ())),        # x:(tm,tk) w:(tn,tk) -> (tm,tn)
        preferred_element_type=jnp.float32,
    )

    @pl.when(k == pl.num_programs(2) - 1)
    def _():
        o_ref[...] = (acc_ref[...] + b_ref[...].astype(jnp.float32)).astype(o_ref.dtype)


@functools.partial(jax.jit, static_argnames=("tm", "tn", "tk"))
def linear_mask_forward(x, weight, bias, keep, *, tm=256, tn=512, tk=512):
    """x: (M, K), weight: (N, K), bias: (N,), keep: (K,) 0/1 -> (M, N)."""
    M, K = x.shape
    N = weight.shape[0]
    out_dtype = x.dtype

    # Effective tile sizes, clamped to the (8,128)-aligned padded dims.
    tm_e = min(tm, _round_up(M, 8))
    tn_e = min(tn, _round_up(N, 128))
    tk_e = min(tk, _round_up(K, 128))
    Mp, Np, Kp = _round_up(M, tm_e), _round_up(N, tn_e), _round_up(K, tk_e)

    # Zero-pad operands to tile multiples (lane-dense N, aligned K blocks).
    xp = jnp.pad(x, ((0, Mp - M), (0, Kp - K)))
    wp = jnp.pad(weight, ((0, Np - N), (0, Kp - K)))
    bp = jnp.pad(bias, (0, Np - N)).reshape(1, Np)
    kp = jnp.pad(keep.astype(weight.dtype), (0, Kp - K)).reshape(1, Kp)

    grid = (Mp // tm_e, Np // tn_e, Kp // tk_e)

    cost = pl.CostEstimate(
        flops=2 * Mp * Np * Kp,
        transcendentals=0,
        bytes_accessed=(xp.size * xp.dtype.itemsize
                        + wp.size * wp.dtype.itemsize
                        + bp.size * bp.dtype.itemsize
                        + kp.size * kp.dtype.itemsize
                        + Mp * Np * jnp.dtype(out_dtype).itemsize),
    )

    out_p = pl.pallas_call(
        _linear_mask_kernel,
        out_shape=jax.ShapeDtypeStruct((Mp, Np), out_dtype),
        grid_spec=pltpu.PrefetchScalarGridSpec(
            num_scalar_prefetch=0,
            grid=grid,
            in_specs=[
                pl.BlockSpec((tm_e, tk_e), lambda i, j, k: (i, k)),   # x
                pl.BlockSpec((tn_e, tk_e), lambda i, j, k: (j, k)),   # weight
                pl.BlockSpec((1, tk_e), lambda i, j, k: (0, k)),      # keep
                pl.BlockSpec((1, tn_e), lambda i, j, k: (0, j)),      # bias
            ],
            out_specs=pl.BlockSpec((tm_e, tn_e), lambda i, j, k: (i, j)),
            scratch_shapes=[pltpu.VMEM((tm_e, tn_e), jnp.float32)],
        ),
        compiler_params=pltpu.CompilerParams(
            dimension_semantics=("parallel", "parallel", "arbitrary"),
            vmem_limit_bytes=64 * 1024 * 1024,
        ),
        cost_estimate=cost,
    )(xp, wp, kp, bp)

    return out_p[:M, :N]


class LinearMask:
    """JAX/Pallas equivalent of the PyTorch LinearMask module (forward only)."""
    # TODO(synk): backward (custom grads w.r.t. input/weight/bias) is not implemented.

    def __init__(self, in_features, out_features, key, bias=True):
        self.in_features = in_features
        self.out_features = out_features
        k_w, k_b = jax.random.split(key)
        bound = 1.0 / (in_features ** 0.5)
        # Mimic nn.Linear's uniform(-1/sqrt(K), 1/sqrt(K)) init.
        self.weight = jax.random.uniform(
            k_w, (out_features, in_features), jnp.float32, -bound, bound)
        if bias:
            self.bias = jax.random.uniform(
                k_b, (out_features,), jnp.float32, -bound, bound)
        else:
            self.bias = jnp.zeros((out_features,), jnp.float32)

    def __call__(self, x, mask_indices):
        # Glue: list of masked input-feature indices -> dense 0/1 keep vector.
        mask_idx = jnp.asarray(mask_indices, dtype=jnp.int32)
        keep = jnp.ones((self.in_features,), self.weight.dtype).at[mask_idx].set(0)
        return linear_mask_forward(x, self.weight, self.bias, keep)


if __name__ == "__main__":
    key = jax.random.PRNGKey(0)
    k_in, k_mod = jax.random.split(key)

    # Small shapes that still exercise multi-tile K/N accumulation + padding.
    batch, in_features, out_features = 16, 512, 384
    x = jax.random.normal(k_in, (batch, in_features), jnp.float32)
    mask = [1, 5, 7, 300, 511]  # input-feature columns to zero in the weight

    mod = LinearMask(in_features, out_features, k_mod, bias=True)
    out = mod(x, mask)
    out = jax.block_until_ready(out)

    # Reference check in plain JAX (same semantics as the PyTorch forward).
    w_cp = mod.weight.at[:, jnp.asarray(mask)].set(0.0)
    ref = jnp.dot(x, w_cp.T, preferred_element_type=jnp.float32) + mod.bias
    assert out.shape == (batch, out_features)
    assert jnp.allclose(out, ref, atol=1e-3, rtol=1e-3), float(
        jnp.max(jnp.abs(out - ref)))

    print("KERNEL_OK")
</pallas_src>

<mosaic_0001>
module attributes {stable_mosaic.version = 11 : i64} {
  func.func @_linear_mask_kernel(%arg0: i32, %arg1: i32, %arg2: i32, %arg3: memref<16x512xf32, #tpu.memory_space<vmem>>, %arg4: memref<384x512xf32, #tpu.memory_space<vmem>>, %arg5: memref<1x512xf32, #tpu.memory_space<vmem>>, %arg6: memref<1x384xf32, #tpu.memory_space<vmem>>, %arg7: memref<16x384xf32, #tpu.memory_space<vmem>>, %arg8: memref<16x384xf32, #tpu.memory_space<vmem>>) attributes {dimension_semantics = [#tpu.dimension_semantics<parallel>, #tpu.dimension_semantics<parallel>, #tpu.dimension_semantics<arbitrary>], iteration_bounds = array<i64: 1, 1, 1>, scalar_prefetch = 0 : i64, scratch_operands = 1 : i64, tpu.core_type = #tpu.core_type<tc>, window_params = [{transform_indices = @transform_0, window_bounds = array<i64: 16, 512>}, {transform_indices = @transform_1, window_bounds = array<i64: 384, 512>}, {transform_indices = @transform_2, window_bounds = array<i64: 1, 512>}, {transform_indices = @transform_3, window_bounds = array<i64: 1, 384>}, {transform_indices = @transform_4, window_bounds = array<i64: 16, 384>}]} {
    %c0_i32 = arith.constant 0 : i32
    %0 = arith.cmpi eq, %arg2, %c0_i32 : i32
    %1 = arith.extui %0 : i1 to i32
    %c0_i32_0 = arith.constant 0 : i32
    %2 = arith.cmpi ne, %1, %c0_i32_0 : i32
    scf.if %2 {
      %cst_14 = arith.constant 0.000000e+00 : f32
      %19 = vector.broadcast %cst_14 : f32 to vector<16x384xf32>
      %c0_15 = arith.constant 0 : index
      %c0_16 = arith.constant 0 : index
      %20 = vector.load %arg8[%c0_15, %c0_16] : memref<16x384xf32, #tpu.memory_space<vmem>>, vector<16x384xf32>
      tpu.vector_store %arg8[%c0_15, %c0_16], %19 {strides = array<i32>} : memref<16x384xf32, #tpu.memory_space<vmem>>, vector<16x384xf32>,
    } else {
    }
    %c0 = arith.constant 0 : index
    %c0_1 = arith.constant 0 : index
    %3 = vector.load %arg5[%c0, %c0_1] : memref<1x512xf32, #tpu.memory_space<vmem>>, vector<1x512xf32>
    %cst = arith.constant 0.000000e+00 : f32
    %4 = vector.broadcast %cst : f32 to vector<1x512xf32>
    %5 = arith.cmpf one, %3, %4 : vector<1x512xf32>
    %c0_2 = arith.constant 0 : index
    %c0_3 = arith.constant 0 : index
    %6 = vector.load %arg4[%c0_2, %c0_3] : memref<384x512xf32, #tpu.memory_space<vmem>>, vector<384x512xf32>
    %cst_4 = arith.constant 0.000000e+00 : f32
    %7 = vector.broadcast %cst_4 : f32 to vector<384x512xf32>
    %8 = vector.shape_cast %5 : vector<1x512xi1> to vector<1x512xi1>
    %9 = vector.broadcast %8 : vector<1x512xi1> to vector<384x512xi1>
    %10 = arith.select %9, %6, %7 : vector<384x512xi1>, vector<384x512xf32>
    %c0_5 = arith.constant 0 : index
    %c0_6 = arith.constant 0 : index
    %11 = vector.load %arg8[%c0_5, %c0_6] : memref<16x384xf32, #tpu.memory_space<vmem>>, vector<16x384xf32>
    %c0_7 = arith.constant 0 : index
    %c0_8 = arith.constant 0 : index
    %12 = vector.load %arg3[%c0_7, %c0_8] : memref<16x512xf32, #tpu.memory_space<vmem>>, vector<16x512xf32>
    %cst_9 = arith.constant dense<0.000000e+00> : vector<16x384xf32>
    %13 = tpu.matmul %12, %10, %cst_9 {dimension_numbers = #tpu.dot_dimension_numbers<[1], [1], [0], [0], [0, 0, 1, 0], [], []>} : vector<16x512xf32>, vector<384x512xf32>, vector<16x384xf32> -> vector<16x384xf32>
    %14 = arith.addf %11, %13 : vector<16x384xf32>
    %c0_10 = arith.constant 0 : index
    %c0_11 = arith.constant 0 : index
    %15 = vector.load %arg8[%c0_10, %c0_11] : memref<16x384xf32, #tpu.memory_space<vmem>>, vector<16x384xf32>
    tpu.vector_store %arg8[%c0_10, %c0_11], %14 {strides = array<i32>} : memref<16x384xf32, #tpu.memory_space<vmem>>, vector<16x384xf32>,
    %c0_i32_12 = arith.constant 0 : i32
    %16 = arith.cmpi eq, %arg2, %c0_i32_12 : i32
    %17 = arith.extui %16 : i1 to i32
    %c0_i32_13 = arith.constant 0 : i32
    %18 = arith.cmpi ne, %17, %c0_i32_13 : i32
    scf.if %18 {
      %c0_14 = arith.constant 0 : index
      %c0_15 = arith.constant 0 : index
      %19 = vector.load %arg8[%c0_14, %c0_15] : memref<16x384xf32, #tpu.memory_space<vmem>>, vector<16x384xf32>
      %c0_16 = arith.constant 0 : index
      %c0_17 = arith.constant 0 : index
      %20 = vector.load %arg6[%c0_16, %c0_17] : memref<1x384xf32, #tpu.memory_space<vmem>>, vector<1x384xf32>
      %21 = vector.broadcast %20 : vector<1x384xf32> to vector<16x384xf32>
      %22 = arith.addf %19, %21 : vector<16x384xf32>
      %c0_18 = arith.constant 0 : index
      %c0_19 = arith.constant 0 : index
      %23 = vector.load %arg7[%c0_18, %c0_19] : memref<16x384xf32, #tpu.memory_space<vmem>>, vector<16x384xf32>
      tpu.vector_store %arg7[%c0_18, %c0_19], %22 {strides = array<i32>} : memref<16x384xf32, #tpu.memory_space<vmem>>, vector<16x384xf32>,
    } else {
    }
    return
  }
  func.func @transform_0(%arg0: i32, %arg1: i32, %arg2: i32) -> (i32, i32) {
    %c0_i32 = arith.constant 0 : i32
    return %arg0, %arg2 : i32, i32
  }
  func.func @transform_1(%arg0: i32, %arg1: i32, %arg2: i32) -> (i32, i32) {
    %c0_i32 = arith.constant 0 : i32
    return %arg1, %arg2 : i32, i32
  }
  func.func @transform_2(%arg0: i32, %arg1: i32, %arg2: i32) -> (i32, i32) {
    %c0_i32 = arith.constant 0 : i32
    %c0_i32_0 = arith.constant 0 : i32
    return %c0_i32, %arg2 : i32, i32
  }
  func.func @transform_3(%arg0: i32, %arg1: i32, %arg2: i32) -> (i32, i32) {
    %c0_i32 = arith.constant 0 : i32
    %c0_i32_0 = arith.constant 0 : i32
    return %c0_i32, %arg1 : i32, i32
  }
  func.func @transform_4(%arg0: i32, %arg1: i32, %arg2: i32) -> (i32, i32) {
    %c0_i32 = arith.constant 0 : i32
    return %arg0, %arg1 : i32, i32
  }
}

</mosaic_0001>

<llo_original>
// kernel: linear_mask_forward.1
$region0: #{linear_mask_forward.1}
  #allocation0 [shape = 'u32[]', space=smem, size = 0x4, offset = 0x4, fixed_abs, tag = 'smem constant byte address 0x4 - core index']
  #allocation1 [shape = 'u32[144,128]{1,0:T(1,128)}', space=vmem, size = 0x12000, scoped, tag = 'internal scratch']
  #allocation2 [shape = 'f32[16,384]{1,0:T(8,128)}', space=vmem, size = 0x6000, scoped, tag = 'scratch operand']
  %s0 = inlined_call_operand.hbm [shape: f32[16,512], index: 0, kind: input, shape index: {}]
  %s1 = inlined_call_operand.hbm [shape: f32[384,512], index: 1, kind: input, shape index: {}]
  %s2 = inlined_call_operand.hbm [shape: f32[1,512], index: 2, kind: input, shape index: {}]
  %s3 = inlined_call_operand.hbm [shape: f32[1,384], index: 3, kind: input, shape index: {}]
  %s4 = inlined_call_operand.hbm [shape: f32[16,384], index: 4, kind: output, shape index: {}]
  %s5 = sld [smem:[#allocation0]]
  $region50: #{linear_mask_forward.1} parent=0
    _
  %s7 = ssub.s32 1, %s5
  %s8 = scalar_select 0, %s7, %s5
  $region1: #{linear_mask_forward.1} parent=0
    #allocation3 [shape = 'u8[32768]{0}', space=vmem, size = 0x8000, scoped, tag = 'input window, operand 0, single buffered']
    #allocation4 [shape = 's32[1]{0}', space=sflag, size = 0x4, scoped, tag = 'scoped memory for linear_mask_forward.1']
    #allocation5 [shape = 's32[1]{0}', space=sflag, size = 0x4, scoped, tag = 'scoped memory for linear_mask_forward.1']
    #allocation6 [shape = 'u8[786432]{0}', space=vmem, size = 0xc0000, scoped, tag = 'input window, operand 1, single buffered']
    #allocation7 [shape = 's32[1]{0}', space=sflag, size = 0x4, scoped, tag = 'scoped memory for linear_mask_forward.1']
    #allocation8 [shape = 'u8[2048]{0}', space=vmem, size = 0x800, scoped, tag = 'input window, operand 2, single buffered']
    #allocation9 [shape = 'u8[1536]{0}', space=vmem, size = 0x800, scoped, tag = 'input window, operand 3, single buffered']
    #allocation10 [shape = 's32[1]{0}', space=sflag, size = 0x4, scoped, tag = 'scoped memory for linear_mask_forward.1']
    #allocation11 [shape = 'u8[24576]{0}', space=vmem, size = 0x6000, scoped, tag = 'output window, operand 0, single buffered']
    %9 = vsyncpa [#allocation4], 0
    %10 = vsyncpa [#allocation7], 0
    %11 = vsyncpa [#allocation10], 0
    %12 = vsyncpa [#allocation5], 0
    // Predicated region
    $region2: #{linear_mask_forward.1} parent=1 // pred_check
      _
    $region3: #{linear_mask_forward.1} parent=1 // pred_check_branch
      %14 = sbr.rel (0) target = $region5
    $region4: #{linear_mask_forward.1} parent=1 // pred_region
      %s16 = ssub.s32 1024, 1024
      %17 = vsyncadd [#allocation4], %s16
      %s18 = sshll.u32 [#allocation3], 4
      %s19 = int_to_ptr.vmem [resolvable:$true] %s18
      %24 = dma.hbm_to_vmem [thread:$0]  %s0, 1024, %s19, [#allocation4], 512, 512, 32
    $region5: #{linear_mask_forward.1} parent=1 // pred_fallthru
      _
    // Predicated region
    $region6: #{linear_mask_forward.1} parent=1 // pred_check
      _
    $region7: #{linear_mask_forward.1} parent=1 // pred_check_branch
      %26 = sbr.rel (0) target = $region9
    $region8: #{linear_mask_forward.1} parent=1 // pred_region
      %s28 = ssub.s32 24576, 24576
      %29 = vsyncadd [#allocation7], %s28
      %s30 = sshll.u32 [#allocation6], 4
      %s31 = int_to_ptr.vmem [resolvable:$true] %s30
      %36 = dma.hbm_to_vmem [thread:$0]  %s1, 24576, %s31, [#allocation7], 512, 512, 32
    $region9: #{linear_mask_forward.1} parent=1 // pred_fallthru
      _
    // Predicated region
    $region10: #{linear_mask_forward.1} parent=1 // pred_check
      _
    $region11: #{linear_mask_forward.1} parent=1 // pred_check_branch
      %38 = sbr.rel (0) target = $region13
    $region12: #{linear_mask_forward.1} parent=1 // pred_region
      %s40 = ssub.s32 64, 64
      %41 = vsyncadd [#allocation7], %s40
      %s43 = sshll.u32 [#allocation8], 4
      %s44 = int_to_ptr.vmem [resolvable:$true] %s43
      %46 = dma.hbm_to_vmem [thread:$0]  %s2, 64, %s44, [#allocation7]
    $region13: #{linear_mask_forward.1} parent=1 // pred_fallthru
      _
    // Predicated region
    $region14: #{linear_mask_forward.1} parent=1 // pred_check
      _
    $region15: #{linear_mask_forward.1} parent=1 // pred_check_branch
      %48 = sbr.rel (0) target = $region17
    $region16: #{linear_mask_forward.1} parent=1 // pred_region
      %s50 = ssub.s32 48, 48
      %51 = vsyncadd [#allocation10], %s50
      %s53 = sshll.u32 [#allocation9], 4
      %s54 = int_to_ptr.vmem [resolvable:$true] %s53
      %56 = dma.hbm_to_vmem [thread:$0]  %s3, 48, %s54, [#allocation10]
    $region17: #{linear_mask_forward.1} parent=1 // pred_fallthru
      _
    // Predicated region
    $region18: #{linear_mask_forward.1} parent=1 // pred_check
      _
    $region19: #{linear_mask_forward.1} parent=1 // pred_check_branch
      %58 = sbr.rel (0) target = $region21
    $region20: #{linear_mask_forward.1} parent=1 // pred_region
      %59 = dma.done [#allocation4], 1024
    $region21: #{linear_mask_forward.1} parent=1 // pred_fallthru
      _
    // Predicated region
    $region22: #{linear_mask_forward.1} parent=1 // pred_check
      _
    $region23: #{linear_mask_forward.1} parent=1 // pred_check_branch
      %61 = sbr.rel (0) target = $region25
    $region24: #{linear_mask_forward.1} parent=1 // pred_region
      %62 = dma.done [#allocation7], 24576
    $region25: #{linear_mask_forward.1} parent=1 // pred_fallthru
      _
    // Predicated region
    $region26: #{linear_mask_forward.1} parent=1 // pred_check
      _
    $region27: #{linear_mask_forward.1} parent=1 // pred_check_branch
      %64 = sbr.rel (0) target = $region29
    $region28: #{linear_mask_forward.1} parent=1 // pred_region
      %65 = dma.done [#allocation7], 64
    $region29: #{linear_mask_forward.1} parent=1 // pred_fallthru
      _
    // Predicated region
    $region30: #{linear_mask_forward.1} parent=1 // pred_check
      _
    $region31: #{linear_mask_forward.1} parent=1 // pred_check_branch
      %67 = sbr.rel (0) target = $region33
    $region32: #{linear_mask_forward.1} parent=1 // pred_region
      %68 = dma.done [#allocation10], 48
    $region33: #{linear_mask_forward.1} parent=1 // pred_fallthru
      _
    %p69 = scmp.eq.s32.totalorder 0, 0
    // Predicated region
    $region34: #{linear_mask_forward.1} parent=1 // pred_check
      %p70 = pneg %p69
    $region35: #{linear_mask_forward.1} parent=1 // pred_check_branch
      %72 = sbr.rel (%p70) target = $region37
    $region36: #{linear_mask_forward.1} parent=1 // pred_region
      %73 = vst [vmem:[#allocation2] sm:$0xff] 0.0
      %74 = vst [vmem:[#allocation2 + $0x8] sm:$0xff] 0.0
      %75 = vst [vmem:[#allocation2 + $0x10] sm:$0xff] 0.0
      %76 = vst [vmem:[#allocation2 + $0x18] sm:$0xff] 0.0
      %77 = vst [vmem:[#allocation2 + $0x20] sm:$0xff] 0.0
      %78 = vst [vmem:[#allocation2 + $0x28] sm:$0xff] 0.0
    $region37: #{linear_mask_forward.1} parent=1 // pred_fallthru
      _
    %v79 = vld [vmem:[#allocation8] sm:$0xf]
    %vm80 = vcmp.ne.f32.partialorder %v79, 0.0
    %v81 = vld [vmem:[#allocation6] sm:$0xff]
    %v82 = vld [vmem:[#allocation6 + $0x8] sm:$0xff]
    %v83 = vld [vmem:[#allocation6 + $0x10] sm:$0xff]
    %v84 = vld [vmem:[#allocation6 + $0x18] sm:$0xff]
    %v85 = vld [vmem:[#allocation6 + $0x20] sm:$0xff]
    %v86 = vld [vmem:[#allocation6 + $0x28] sm:$0xff]
    %v87 = vld [vmem:[#allocation6 + $0x30] sm:$0xff]
    %v88 = vld [vmem:[#allocation6 + $0x38] sm:$0xff]
    %v89 = vld [vmem:[#allocation6 + $0x40] sm:$0xff]
    %v90 = vld [vmem:[#allocation6 + $0x48] sm:$0xff]
    %v91 = vld [vmem:[#allocation6 + $0x50] sm:$0xff]
    %v92 = vld [vmem:[#allocation6 + $0x58] sm:$0xff]
    %v93 = vld [vmem:[#allocation6 + $0x60] sm:$0xff]
    %v94 = vld [vmem:[#allocation6 + $0x68] sm:$0xff]
    %v95 = vld [vmem:[#allocation6 + $0x70] sm:$0xff]
    %v96 = vld [vmem:[#allocation6 + $0x78] sm:$0xff]
    %v97 = vld [vmem:[#allocation6 + $0x80] sm:$0xff]
    %v98 = vld [vmem:[#allocation6 + $0x88] sm:$0xff]
    %v99 = vld [vmem:[#allocation6 + $0x90] sm:$0xff]
    %v100 = vld [vmem:[#allocation6 + $0x98] sm:$0xff]
    %v101 = vld [vmem:[#allocation6 + $0xa0] sm:$0xff]
    %v102 = vld [vmem:[#allocation6 + $0xa8] sm:$0xff]
    %v103 = vld [vmem:[#allocation6 + $0xb0] sm:$0xff]
    %v104 = vld [vmem:[#allocation6 + $0xb8] sm:$0xff]
    %v105 = vld [vmem:[#allocation6 + $0xc0] sm:$0xff]
    %v106 = vld [vmem:[#allocation6 + $0xc8] sm:$0xff]
    %v107 = vld [vmem:[#allocation6 + $0xd0] sm:$0xff]
    %v108 = vld [vmem:[#allocation6 + $0xd8] sm:$0xff]
    %v109 = vld [vmem:[#allocation6 + $0xe0] sm:$0xff]
    %v110 = vld [vmem:[#allocation6 + $0xe8] sm:$0xff]
    %v111 = vld [vmem:[#allocation6 + $0xf0] sm:$0xff]
    %v112 = vld [vmem:[#allocation6 + $0xf8] sm:$0xff]
    %v113 = vld [vmem:[#allocation6 + $0x100] sm:$0xff]
    %v114 = vld [vmem:[#allocation6 + $0x108] sm:$0xff]
    %v115 = vld [vmem:[#allocation6 + $0x110] sm:$0xff]
    %v116 = vld [vmem:[#allocation6 + $0x118] sm:$0xff]
    %v117 = vld [vmem:[#allocation6 + $0x120] sm:$0xff]
    %v118 = vld [vmem:[#allocation6 + $0x128] sm:$0xff]
    %v119 = vld [vmem:[#allocation6 + $0x130] sm:$0xff]
    %v120 = vld [vmem:[#allocation6 + $0x138] sm:$0xff]
    %v121 = vld [vmem:[#allocation6 + $0x140] sm:$0xff]
    %v122 = vld [vmem:[#allocation6 + $0x148] sm:$0xff]
    %v123 = vld [vmem:[#allocation6 + $0x150] sm:$0xff]
    %v124 = vld [vmem:[#allocation6 + $0x158] sm:$0xff]
    %v125 = vld [vmem:[#allocation6 + $0x160] sm:$0xff]
    %v126 = vld [vmem:[#allocation6 + $0x168] sm:$0xff]
    %v127 = vld [vmem:[#allocation6 + $0x170] sm:$0xff]
    %v128 = vld [vmem:[#allocation6 + $0x178] sm:$0xff]
    %v129 = vld [vmem:[#allocation6 + $0x180] sm:$0xff]
    %v130 = vld [vmem:[#allocation6 + $0x188] sm:$0xff]
    %v131 = vld [vmem:[#allocation6 + $0x190] sm:$0xff]
    %v132 = vld [vmem:[#allocation6 + $0x198] sm:$0xff]
    %v133 = vld [vmem:[#allocation6 + $0x1a0] sm:$0xff]
    %v134 = vld [vmem:[#allocation6 + $0x1a8] sm:$0xff]
    %v135 = vld [vmem:[#allocation6 + $0x1b0] sm:$0xff]
    %v136 = vld [vmem:[#allocation6 + $0x1b8] sm:$0xff]
    %v137 = vld [vmem:[#allocation6 + $0x1c0] sm:$0xff]
    %v138 = vld [vmem:[#allocation6 + $0x1c8] sm:$0xff]
    %v139 = vld [vmem:[#allocation6 + $0x1d0] sm:$0xff]
    %v140 = vld [vmem:[#allocation6 + $0x1d8] sm:$0xff]
    %v141 = vld [vmem:[#allocation6 + $0x1e0] sm:$0xff]
    %v142 = vld [vmem:[#allocation6 + $0x1e8] sm:$0xff]
    %v143 = vld [vmem:[#allocation6 + $0x1f0] sm:$0xff]
    %v144 = vld [vmem:[#allocation6 + $0x1f8] sm:$0xff]
    %v145 = vld [vmem:[#allocation6 + $0x200] sm:$0xff]
    %v146 = vld [vmem:[#allocation6 + $0x208] sm:$0xff]
    %v147 = vld [vmem:[#allocation6 + $0x210] sm:$0xff]
    %v148 = vld [vmem:[#allocation6 + $0x218] sm:$0xff]
    %v149 = vld [vmem:[#allocation6 + $0x220] sm:$0xff]
    %v150 = vld [vmem:[#allocation6 + $0x228] sm:$0xff]
    %v151 = vld [vmem:[#allocation6 + $0x230] sm:$0xff]
    %v152 = vld [vmem:[#allocation6 + $0x238] sm:$0xff]
    %v153 = vld [vmem:[#allocation6 + $0x240] sm:$0xff]
    %v154 = vld [vmem:[#allocation6 + $0x248] sm:$0xff]
    %v155 = vld [vmem:[#allocation6 + $0x250] sm:$0xff]
    %v156 = vld [vmem:[#allocation6 + $0x258] sm:$0xff]
    %v157 = vld [vmem:[#allocation6 + $0x260] sm:$0xff]
    %v158 = vld [vmem:[#allocation6 + $0x268] sm:$0xff]
    %v159 = vld [vmem:[#allocation6 + $0x270] sm:$0xff]
    %v160 = vld [vmem:[#allocation6 + $0x278] sm:$0xff]
    %v161 = vld [vmem:[#allocation6 + $0x280] sm:$0xff]
    %v162 = vld [vmem:[#allocation6 + $0x288] sm:$0xff]
    %v163 = vld [vmem:[#allocation6 + $0x290] sm:$0xff]
    %v164 = vld [vmem:[#allocation6 + $0x298] sm:$0xff]
    %v165 = vld [vmem:[#allocation6 + $0x2a0] sm:$0xff]
    %v166 = vld [vmem:[#allocation6 + $0x2a8] sm:$0xff]
    %v167 = vld [vmem:[#allocation6 + $0x2b0] sm:$0xff]
    %v168 = vld [vmem:[#allocation6 + $0x2b8] sm:$0xff]
    %v169 = vld [vmem:[#allocation6 + $0x2c0] sm:$0xff]
    %v170 = vld [vmem:[#allocation6 + $0x2c8] sm:$0xff]
    %v171 = vld [vmem:[#allocation6 + $0x2d0] sm:$0xff]
    %v172 = vld [vmem:[#allocation6 + $0x2d8] sm:$0xff]
    %v173 = vld [vmem:[#allocation6 + $0x2e0] sm:$0xff]
    %v174 = vld [vmem:[#allocation6 + $0x2e8] sm:$0xff]
    %v175 = vld [vmem:[#allocation6 + $0x2f0] sm:$0xff]
    %v176 = vld [vmem:[#allocation6 + $0x2f8] sm:$0xff]
    %v177 = vld [vmem:[#allocation6 + $0x300] sm:$0xff]
    %v178 = vld [vmem:[#allocation6 + $0x308] sm:$0xff]
    %v179 = vld [vmem:[#allocation6 + $0x310] sm:$0xff]
    %v180 = vld [vmem:[#allocation6 + $0x318] sm:$0xff]
    %v181 = vld [vmem:[#allocation6 + $0x320] sm:$0xff]
    %v182 = vld [vmem:[#allocation6 + $0x328] sm:$0xff]
    %v183 = vld [vmem:[#allocation6 + $0x330] sm:$0xff]
    %v184 = vld [vmem:[#allocation6 + $0x338] sm:$0xff]
    %v185 = vld [vmem:[#allocation6 + $0x340] sm:$0xff]
    %v186 = vld [vmem:[#allocation6 + $0x348] sm:$0xff]
    %v187 = vld [vmem:[#allocation6 + $0x350] sm:$0xff]
    %v188 = vld [vmem:[#allocation6 + $0x358] sm:$0xff]
    %v189 = vld [vmem:[#allocation6 + $0x360] sm:$0xff]
    %v190 = vld [vmem:[#allocation6 + $0x368] sm:$0xff]
    %v191 = vld [vmem:[#allocation6 + $0x370] sm:$0xff]
    %v192 = vld [vmem:[#allocation6 + $0x378] sm:$0xff]
    %v193 = vld [vmem:[#allocation6 + $0x380] sm:$0xff]
    %v194 = vld [vmem:[#allocation6 + $0x388] sm:$0xff]
    %v195 = vld [vmem:[#allocation6 + $0x390] sm:$0xff]
    %v196 = vld [vmem:[#allocation6 + $0x398] sm:$0xff]
    %v197 = vld [vmem:[#allocation6 + $0x3a0] sm:$0xff]
    %v198 = vld [vmem:[#allocation6 + $0x3a8] sm:$0xff]
    %v199 = vld [vmem:[#allocation6 + $0x3b0] sm:$0xff]
    %v200 = vld [vmem:[#allocation6 + $0x3b8] sm:$0xff]
    %v201 = vld [vmem:[#allocation6 + $0x3c0] sm:$0xff]
    %v202 = vld [vmem:[#allocation6 + $0x3c8] sm:$0xff]
    %v203 = vld [vmem:[#allocation6 + $0x3d0] sm:$0xff]
    %v204 = vld [vmem:[#allocation6 + $0x3d8] sm:$0xff]
    %v205 = vld [vmem:[#allocation6 + $0x3e0] sm:$0xff]
    %v206 = vld [vmem:[#allocation6 + $0x3e8] sm:$0xff]
    %v207 = vld [vmem:[#allocation6 + $0x3f0] sm:$0xff]
    %v208 = vld [vmem:[#allocation6 + $0x3f8] sm:$0xff]
    %v209 = vld [vmem:[#allocation6 + $0x400] sm:$0xff]
    %v210 = vld [vmem:[#allocation6 + $0x408] sm:$0xff]
    %v211 = vld [vmem:[#allocation6 + $0x410] sm:$0xff]
    %v212 = vld [vmem:[#allocation6 + $0x418] sm:$0xff]
    %v213 = vld [vmem:[#allocation6 + $0x420] sm:$0xff]
    %v214 = vld [vmem:[#allocation6 + $0x428] sm:$0xff]
    %v215 = vld [vmem:[#allocation6 + $0x430] sm:$0xff]
    %v216 = vld [vmem:[#allocation6 + $0x438] sm:$0xff]
    %v217 = vld [vmem:[#allocation6 + $0x440] sm:$0xff]
    %v218 = vld [vmem:[#allocation6 + $0x448] sm:$0xff]
    %v219 = vld [vmem:[#allocation6 + $0x450] sm:$0xff]
    %v220 = vld [vmem:[#allocation6 + $0x458] sm:$0xff]
    %v221 = vld [vmem:[#allocation6 + $0x460] sm:$0xff]
    %v222 = vld [vmem:[#allocation6 + $0x468] sm:$0xff]
    %v223 = vld [vmem:[#allocation6 + $0x470] sm:$0xff]
    %v224 = vld [vmem:[#allocation6 + $0x478] sm:$0xff]
    %v225 = vld [vmem:[#allocation6 + $0x480] sm:$0xff]
    %v226 = vld [vmem:[#allocation6 + $0x488] sm:$0xff]
    %v227 = vld [vmem:[#allocation6 + $0x490] sm:$0xff]
    %v228 = vld [vmem:[#allocation6 + $0x498] sm:$0xff]
    %v229 = vld [vmem:[#allocation6 + $0x4a0] sm:$0xff]
    %v230 = vld [vmem:[#allocation6 + $0x4a8] sm:$0xff]
    %v231 = vld [vmem:[#allocation6 + $0x4b0] sm:$0xff]
    %v232 = vld [vmem:[#allocation6 + $0x4b8] sm:$0xff]
    %v233 = vld [vmem:[#allocation6 + $0x4c0] sm:$0xff]
    %v234 = vld [vmem:[#allocation6 + $0x4c8] sm:$0xff]
    %v235 = vld [vmem:[#allocation6 + $0x4d0] sm:$0xff]
    %v236 = vld [vmem:[#allocation6 + $0x4d8] sm:$0xff]
    %v237 = vld [vmem:[#allocation6 + $0x4e0] sm:$0xff]
    %v238 = vld [vmem:[#allocation6 + $0x4e8] sm:$0xff]
    %v239 = vld [vmem:[#allocation6 + $0x4f0] sm:$0xff]
    %v240 = vld [vmem:[#allocation6 + $0x4f8] sm:$0xff]
    %v241 = vld [vmem:[#allocation6 + $0x500] sm:$0xff]
    %v242 = vld [vmem:[#allocation6 + $0x508] sm:$0xff]
    %v243 = vld [vmem:[#allocation6 + $0x510] sm:$0xff]
    %v244 = vld [vmem:[#allocation6 + $0x518] sm:$0xff]
    %v245 = vld [vmem:[#allocation6 + $0x520] sm:$0xff]
    %v246 = vld [vmem:[#allocation6 + $0x528] sm:$0xff]
    %v247 = vld [vmem:[#allocation6 + $0x530] sm:$0xff]
    %v248 = vld [vmem:[#allocation6 + $0x538] sm:$0xff]
    %v249 = vld [vmem:[#allocation6 + $0x540] sm:$0xff]
    %v250 = vld [vmem:[#allocation6 + $0x548] sm:$0xff]
    %v251 = vld [vmem:[#allocation6 + $0x550] sm:$0xff]
    %v252 = vld [vmem:[#allocation6 + $0x558] sm:$0xff]
    %v253 = vld [vmem:[#allocation6 + $0x560] sm:$0xff]
    %v254 = vld [vmem:[#allocation6 + $0x568] sm:$0xff]
    %v255 = vld [vmem:[#allocation6 + $0x570] sm:$0xff]
    %v256 = vld [vmem:[#allocation6 + $0x578] sm:$0xff]
    %v257 = vld [vmem:[#allocation6 + $0x580] sm:$0xff]
    %v258 = vld [vmem:[#allocation6 + $0x588] sm:$0xff]
    %v259 = vld [vmem:[#allocation6 + $0x590] sm:$0xff]
    %v260 = vld [vmem:[#allocation6 + $0x598] sm:$0xff]
    %v261 = vld [vmem:[#allocation6 + $0x5a0] sm:$0xff]
    %v262 = vld [vmem:[#allocation6 + $0x5a8] sm:$0xff]
    %v263 = vld [vmem:[#allocation6 + $0x5b0] sm:$0xff]
    %v264 = vld [vmem:[#allocation6 + $0x5b8] sm:$0xff]
    %v265 = vld [vmem:[#allocation6 + $0x5c0] sm:$0xff]
    %v266 = vld [vmem:[#allocation6 + $0x5c8] sm:$0xff]
    %v267 = vld [vmem:[#allocation6 + $0x5d0] sm:$0xff]
    %v268 = vld [vmem:[#allocation6 + $0x5d8] sm:$0xff]
    %v269 = vld [vmem:[#allocation6 + $0x5e0] sm:$0xff]
    %v270 = vld [vmem:[#allocation6 + $0x5e8] sm:$0xff]
    %v271 = vld [vmem:[#allocation6 + $0x5f0] sm:$0xff]
    %v272 = vld [vmem:[#allocation6 + $0x5f8] sm:$0xff]
    %v273 = vsel %vm80, 1, 0
    %v274 = vlaneseq
    %v275 = vshrl.u32 %v274, 7
    %v276 = vsub.s32 0, %v275
    %v277 = vrot.slane %v273, %v276
    %v278 = vlaneseq
    %v279 = vshrl.u32 %v278, 7
    %v280 = vsub.s32 1, %v279
    %v281 = vrot.slane %v273, %v280
    %v282 = vlaneseq
    %v283 = vshrl.u32 %v282, 7
    %v284 = vsub.s32 2, %v283
    %v285 = vrot.slane %v273, %v284
    %v286 = vlaneseq
    %v287 = vshrl.u32 %v286, 7
    %v288 = vsub.s32 3, %v287
    %v289 = vrot.slane %v273, %v288
    %vm290 = vcmp.eq.s32.totalorder %v277, 1
    %vm291 = vcmp.eq.s32.totalorder %v281, 1
    %vm292 = vcmp.eq.s32.totalorder %v285, 1
    %vm293 = vcmp.eq.s32.totalorder %v289, 1
    %v294 = vsel %vm290, %v81, 0.0
    %v295 = vsel %vm291, %v82, 0.0
    %v296 = vsel %vm292, %v83, 0.0
    %v297 = vsel %vm293, %v84, 0.0
    %v298 = vsel %vm290, %v85, 0.0
    %v299 = vsel %vm291, %v86, 0.0
    %v300 = vsel %vm292, %v87, 0.0
    %v301 = vsel %vm293, %v88, 0.0
    %v302 = vsel %vm290, %v89, 0.0
    %v303 = vsel %vm291, %v90, 0.0
    %v304 = vsel %vm292, %v91, 0.0
    %v305 = vsel %vm293, %v92, 0.0
    %v306 = vsel %vm290, %v93, 0.0
    %v307 = vsel %vm291, %v94, 0.0
    %v308 = vsel %vm292, %v95, 0.0
    %v309 = vsel %vm293, %v96, 0.0
    %v310 = vsel %vm290, %v97, 0.0
    %v311 = vsel %vm291, %v98, 0.0
    %v312 = vsel %vm292, %v99, 0.0
    %v313 = vsel %vm293, %v100, 0.0
    %v314 = vsel %vm290, %v101, 0.0
    %v315 = vsel %vm291, %v102, 0.0
    %v316 = vsel %vm292, %v103, 0.0
    %v317 = vsel %vm293, %v104, 0.0
    %v318 = vsel %vm290, %v105, 0.0
    %v319 = vsel %vm291, %v106, 0.0
    %v320 = vsel %vm292, %v107, 0.0
    %v321 = vsel %vm293, %v108, 0.0
    %v322 = vsel %vm290, %v109, 0.0
    %v323 = vsel %vm291, %v110, 0.0
    %v324 = vsel %vm292, %v111, 0.0
    %v325 = vsel %vm293, %v112, 0.0
    %v326 = vsel %vm290, %v113, 0.0
    %v327 = vsel %vm291, %v114, 0.0
    %v328 = vsel %vm292, %v115, 0.0
    %v329 = vsel %vm293, %v116, 0.0
    %v330 = vsel %vm290, %v117, 0.0
    %v331 = vsel %vm291, %v118, 0.0
    %v332 = vsel %vm292, %v119, 0.0
    %v333 = vsel %vm293, %v120, 0.0
    %v334 = vsel %vm290, %v121, 0.0
    %v335 = vsel %vm291, %v122, 0.0
    %v336 = vsel %vm292, %v123, 0.0
    %v337 = vsel %vm293, %v124, 0.0
    %v338 = vsel %vm290, %v125, 0.0
    %v339 = vsel %vm291, %v126, 0.0
    %v340 = vsel %vm292, %v127, 0.0
    %v341 = vsel %vm293, %v128, 0.0
    %v342 = vsel %vm290, %v129, 0.0
    %v343 = vsel %vm291, %v130, 0.0
    %v344 = vsel %vm292, %v131, 0.0
    %v345 = vsel %vm293, %v132, 0.0
    %v346 = vsel %vm290, %v133, 0.0
    %v347 = vsel %vm291, %v134, 0.0
    %v348 = vsel %vm292, %v135, 0.0
    %v349 = vsel %vm293, %v136, 0.0
    %v350 = vsel %vm290, %v137, 0.0
    %v351 = vsel %vm291, %v138, 0.0
    %v352 = vsel %vm292, %v139, 0.0
    %v353 = vsel %vm293, %v140, 0.0
    %v354 = vsel %vm290, %v141, 0.0
    %v355 = vsel %vm291, %v142, 0.0
    %v356 = vsel %vm292, %v143, 0.0
    %v357 = vsel %vm293, %v144, 0.0
    %v358 = vsel %vm290, %v145, 0.0
    %v359 = vsel %vm291, %v146, 0.0
    %v360 = vsel %vm292, %v147, 0.0
    %v361 = vsel %vm293, %v148, 0.0
    %v362 = vsel %vm290, %v149, 0.0
    %v363 = vsel %vm291, %v150, 0.0
    %v364 = vsel %vm292, %v151, 0.0
    %v365 = vsel %vm293, %v152, 0.0
    %v366 = vsel %vm290, %v153, 0.0
    %v367 = vsel %vm291, %v154, 0.0
    %v368 = vsel %vm292, %v155, 0.0
    %v369 = vsel %vm293, %v156, 0.0
    %v370 = vsel %vm290, %v157, 0.0
    %v371 = vsel %vm291, %v158, 0.0
    %v372 = vsel %vm292, %v159, 0.0
    %v373 = vsel %vm293, %v160, 0.0
    %v374 = vsel %vm290, %v161, 0.0
    %v375 = vsel %vm291, %v162, 0.0
    %v376 = vsel %vm292, %v163, 0.0
    %v377 = vsel %vm293, %v164, 0.0
    %v378 = vsel %vm290, %v165, 0.0
    %v379 = vsel %vm291, %v166, 0.0
    %v380 = vsel %vm292, %v167, 0.0
    %v381 = vsel %vm293, %v168, 0.0
    %v382 = vsel %vm290, %v169, 0.0
    %v383 = vsel %vm291, %v170, 0.0
    %v384 = vsel %vm292, %v171, 0.0
    %v385 = vsel %vm293, %v172, 0.0
    %v386 = vsel %vm290, %v173, 0.0
    %v387 = vsel %vm291, %v174, 0.0
    %v388 = vsel %vm292, %v175, 0.0
    %v389 = vsel %vm293, %v176, 0.0
    %v390 = vsel %vm290, %v177, 0.0
    %v391 = vsel %vm291, %v178, 0.0
    %v392 = vsel %vm292, %v179, 0.0
    %v393 = vsel %vm293, %v180, 0.0
    %v394 = vsel %vm290, %v181, 0.0
    %v395 = vsel %vm291, %v182, 0.0
    %v396 = vsel %vm292, %v183, 0.0
    %v397 = vsel %vm293, %v184, 0.0
    %v398 = vsel %vm290, %v185, 0.0
    %v399 = vsel %vm291, %v186, 0.0
    %v400 = vsel %vm292, %v187, 0.0
    %v401 = vsel %vm293, %v188, 0.0
    %v402 = vsel %vm290, %v189, 0.0
    %v403 = vsel %vm291, %v190, 0.0
    %v404 = vsel %vm292, %v191, 0.0
    %v405 = vsel %vm293, %v192, 0.0
    %v406 = vsel %vm290, %v193, 0.0
    %v407 = vsel %vm291, %v194, 0.0
    %v408 = vsel %vm292, %v195, 0.0
    %v409 = vsel %vm293, %v196, 0.0
    %v410 = vsel %vm290, %v197, 0.0
    %v411 = vsel %vm291, %v198, 0.0
    %v412 = vsel %vm292, %v199, 0.0
    %v413 = vsel %vm293, %v200, 0.0
    %v414 = vsel %vm290, %v201, 0.0
    %v415 = vsel %vm291, %v202, 0.0
    %v416 = vsel %vm292, %v203, 0.0
    %v417 = vsel %vm293, %v204, 0.0
    %v418 = vsel %vm290, %v205, 0.0
    %v419 = vsel %vm291, %v206, 0.0
    %v420 = vsel %vm292, %v207, 0.0
    %v421 = vsel %vm293, %v208, 0.0
    %v422 = vsel %vm290, %v209, 0.0
    %v423 = vsel %vm291, %v210, 0.0
    %v424 = vsel %vm292, %v211, 0.0
    %v425 = vsel %vm293, %v212, 0.0
    %v426 = vsel %vm290, %v213, 0.0
    %v427 = vsel %vm291, %v214, 0.0
    %v428 = vsel %vm292, %v215, 0.0
    %v429 = vsel %vm293, %v216, 0.0
    %v430 = vsel %vm290, %v217, 0.0
    %v431 = vsel %vm291, %v218, 0.0
    %v432 = vsel %vm292, %v219, 0.0
    %v433 = vsel %vm293, %v220, 0.0
    %v434 = vsel %vm290, %v221, 0.0
    %v435 = vsel %vm291, %v222, 0.0
    %v436 = vsel %vm292, %v223, 0.0
    %v437 = vsel %vm293, %v224, 0.0
    %v438 = vsel %vm290, %v225, 0.0
    %v439 = vsel %vm291, %v226, 0.0
    %v440 = vsel %vm292, %v227, 0.0
    %v441 = vsel %vm293, %v228, 0.0
    %v442 = vsel %vm290, %v229, 0.0
    %v443 = vsel %vm291, %v230, 0.0
    %v444 = vsel %vm292, %v231, 0.0
    %v445 = vsel %vm293, %v232, 0.0
    %v446 = vsel %vm290, %v233, 0.0
    %v447 = vsel %vm291, %v234, 0.0
    %v448 = vsel %vm292, %v235, 0.0
    %v449 = vsel %vm293, %v236, 0.0
    %v450 = vsel %vm290, %v237, 0.0
    %v451 = vsel %vm291, %v238, 0.0
    %v452 = vsel %vm292, %v239, 0.0
    %v453 = vsel %vm293, %v240, 0.0
    %v454 = vsel %vm290, %v241, 0.0
    %v455 = vsel %vm291, %v242, 0.0
    %v456 = vsel %vm292, %v243, 0.0
    %v457 = vsel %vm293, %v244, 0.0
    %v458 = vsel %vm290, %v245, 0.0
    %v459 = vsel %vm291, %v246, 0.0
    %v460 = vsel %vm292, %v247, 0.0
    %v461 = vsel %vm293, %v248, 0.0
    %v462 = vsel %vm290, %v249, 0.0
    %v463 = vsel %vm291, %v250, 0.0
    %v464 = vsel %vm292, %v251, 0.0
    %v465 = vsel %vm293, %v252, 0.0
    %v466 = vsel %vm290, %v253, 0.0
    %v467 = vsel %vm291, %v254, 0.0
    %v468 = vsel %vm292, %v255, 0.0
    %v469 = vsel %vm293, %v256, 0.0
    %v470 = vsel %vm290, %v257, 0.0
    %v471 = vsel %vm291, %v258, 0.0
    %v472 = vsel %vm292, %v259, 0.0
    %v473 = vsel %vm293, %v260, 0.0
    %v474 = vsel %vm290, %v261, 0.0
    %v475 = vsel %vm291, %v262, 0.0
    %v476 = vsel %vm292, %v263, 0.0
    %v477 = vsel %vm293, %v264, 0.0
    %v478 = vsel %vm290, %v265, 0.0
    %v479 = vsel %vm291, %v266, 0.0
    %v480 = vsel %vm292, %v267, 0.0
    %v481 = vsel %vm293, %v268, 0.0
    %v482 = vsel %vm290, %v269, 0.0
    %v483 = vsel %vm291, %v270, 0.0
    %v484 = vsel %vm292, %v271, 0.0
    %v485 = vsel %vm293, %v272, 0.0
    %v486 = vld [vmem:[#allocation2] sm:$0xff]
    %v487 = vld [vmem:[#allocation2 + $0x8] sm:$0xff]
    %v488 = vld [vmem:[#allocation2 + $0x10] sm:$0xff]
    %v489 = vld [vmem:[#allocation2 + $0x18] sm:$0xff]
    %v490 = vld [vmem:[#allocation2 + $0x20] sm:$0xff]
    %v491 = vld [vmem:[#allocation2 + $0x28] sm:$0xff]
    %v492 = vld [vmem:[#allocation3] sm:$0xff]
    %v493 = vld [vmem:[#allocation3 + $0x8] sm:$0xff]
    %v494 = vld [vmem:[#allocation3 + $0x10] sm:$0xff]
    %v495 = vld [vmem:[#allocation3 + $0x18] sm:$0xff]
    %v496 = vld [vmem:[#allocation3 + $0x20] sm:$0xff]
    %v497 = vld [vmem:[#allocation3 + $0x28] sm:$0xff]
    %v498 = vld [vmem:[#allocation3 + $0x30] sm:$0xff]
    %v499 = vld [vmem:[#allocation3 + $0x38] sm:$0xff]
    %500 = vmatprep.subr.mxu0 %v295
    %501 = vmatpush1.xpose.msra.mxu0 %v294
    %502 = vmatprep.subr.mxu0 %v299
    %503 = vmatpush1.xpose.msra.mxu0 %v298
    %504 = vmatprep.subr.mxu0 %v303
    %505 = vmatpush1.xpose.msra.mxu0 %v302
    %506 = vmatprep.subr.mxu0 %v307
    %507 = vmatpush1.xpose.msra.mxu0 %v306
    %508 = vmatprep.subr.mxu0 %v311
    %509 = vmatpush1.xpose.msra.mxu0 %v310
    %510 = vmatprep.subr.mxu0 %v315
    %511 = vmatpush1.xpose.msra.mxu0 %v314
    %512 = vmatprep.subr.mxu0 %v319
    %513 = vmatpush1.xpose.msra.mxu0 %v318
    %514 = vmatprep.subr.mxu0 %v323
    %515 = vmatpush1.xpose.msra.mxu0 %v322
    %516 = vmatprep.subr.mxu0 %v327
    %517 = vmatpush1.xpose.msra.mxu0 %v326
    %518 = vmatprep.subr.mxu0 %v331
    %519 = vmatpush1.xpose.msra.mxu0 %v330
    %520 = vmatprep.subr.mxu0 %v335
    %521 = vmatpush1.xpose.msra.mxu0 %v334
    %522 = vmatprep.subr.mxu0 %v339
    %523 = vmatpush1.xpose.msra.mxu0 %v338
    %524 = vmatprep.subr.mxu0 %v343
    %525 = vmatpush1.xpose.msra.mxu0 %v342
    %526 = vmatprep.subr.mxu0 %v347
    %527 = vmatpush1.xpose.msra.mxu0 %v346
    %528 = vmatprep.subr.mxu0 %v351
    %529 = vmatpush1.xpose.msra.mxu0 %v350
    %530 = vmatprep.subr.mxu0 %v355
    %531 = vmatpush1.xpose.msra.mxu0 %v354
    %532 = vmatprep.subr.mxu0 %v359
    %533 = vmatpush1.xpose.msra.mxu0 %v358
    %534 = vmatprep.subr.mxu0 %v363
    %535 = vmatpush1.xpose.msra.mxu0 %v362
    %536 = vmatprep.subr.mxu0 %v367
    %537 = vmatpush1.xpose.msra.mxu0 %v366
    %538 = vmatprep.subr.mxu0 %v371
    %539 = vmatpush1.xpose.msra.mxu0 %v370
    %540 = vmatprep.subr.mxu0 %v375
    %541 = vmatpush1.xpose.msra.mxu0 %v374
    %542 = vmatprep.subr.mxu0 %v379
    %543 = vmatpush1.xpose.msra.mxu0 %v378
    %544 = vmatprep.subr.mxu0 %v383
    %545 = vmatpush1.xpose.msra.mxu0 %v382
    %546 = vmatprep.subr.mxu0 %v387
    %547 = vmatpush1.xpose.msra.mxu0 %v386
    %548 = vmatprep.subr.mxu0 %v391
    %549 = vmatpush1.xpose.msra.mxu0 %v390
    %550 = vmatprep.subr.mxu0 %v395
    %551 = vmatpush1.xpose.msra.mxu0 %v394
    %552 = vmatprep.subr.mxu0 %v399
    %553 = vmatpush1.xpose.msra.mxu0 %v398
    %554 = vmatprep.subr.mxu0 %v403
    %555 = vmatpush1.xpose.msra.mxu0 %v402
    %556 = vmatprep.subr.mxu0 %v407
    %557 = vmatpush1.xpose.msra.mxu0 %v406
    %558 = vmatprep.subr.mxu0 %v411
    %559 = vmatpush1.xpose.msra.mxu0 %v410
    %560 = vmatprep.subr.mxu0 %v415
    %561 = vmatpush1.xpose.msra.mxu0 %v414
    %562 = vmatprep.subr.mxu0 %v419
    %563 = vmatpush1.xpose.msra.mxu0 %v418
    %564 = vmatprep.mubr.f32.mxu0 %v493
    %565 = vmatmul.mubr.f32.gmra.mrb[0].mxu0 %v492
    %v566 = vpop.f32.mrb[0].mxu0
    %v567 = vadd.f32 0.0, %v566
    %v568 = vpop.f32.mrb[0].mxu0
    %v569 = vadd.f32 0.0, %v568
    %570 = vmatprep.mubr.f32.mxu0 %v497
    %571 = vmatmul.mubr.f32.gmra.mrb[0].mxu0 %v496
    %v572 = vpop.f32.mrb[0].mxu0
    %v573 = vadd.f32 0.0, %v572
    %v574 = vpop.f32.mrb[0].mxu0
    %v575 = vadd.f32 0.0, %v574
    %576 = vdwg.mxu0
    %577 = vmatprep.subr.mxu0 %v297
    %578 = vmatpush1.xpose.msra.mxu0 %v296
    %579 = vmatprep.subr.mxu0 %v301
    %580 = vmatpush1.xpose.msra.mxu0 %v300
    %581 = vmatprep.subr.mxu0 %v305
    %582 = vmatpush1.xpose.msra.mxu0 %v304
    %583 = vmatprep.subr.mxu0 %v309
    %584 = vmatpush1.xpose.msra.mxu0 %v308
    %585 = vmatprep.subr.mxu0 %v313
    %586 = vmatpush1.xpose.msra.mxu0 %v312
    %587 = vmatprep.subr.mxu0 %v317
    %588 = vmatpush1.xpose.msra.mxu0 %v316
    %589 = vmatprep.subr.mxu0 %v321
    %590 = vmatpush1.xpose.msra.mxu0 %v320
    %591 = vmatprep.subr.mxu0 %v325
    %592 = vmatpush1.xpose.msra.mxu0 %v324
    %593 = vmatprep.subr.mxu0 %v329
    %594 = vmatpush1.xpose.msra.mxu0 %v328
    %595 = vmatprep.subr.mxu0 %v333
    %596 = vmatpush1.xpose.msra.mxu0 %v332
    %597 = vmatprep.subr.mxu0 %v337
    %598 = vmatpush1.xpose.msra.mxu0 %v336
    %599 = vmatprep.subr.mxu0 %v341
    %600 = vmatpush1.xpose.msra.mxu0 %v340
    %601 = vmatprep.subr.mxu0 %v345
    %602 = vmatpush1.xpose.msra.mxu0 %v344
    %603 = vmatprep.subr.mxu0 %v349
    %604 = vmatpush1.xpose.msra.mxu0 %v348
    %605 = vmatprep.subr.mxu0 %v353
    %606 = vmatpush1.xpose.msra.mxu0 %v352
    %607 = vmatprep.subr.mxu0 %v357
    %608 = vmatpush1.xpose.msra.mxu0 %v356
    %609 = vmatprep.subr.mxu0 %v361
    %610 = vmatpush1.xpose.msra.mxu0 %v360
    %611 = vmatprep.subr.mxu0 %v365
    %612 = vmatpush1.xpose.msra.mxu0 %v364
    %613 = vmatprep.subr.mxu0 %v369
    %614 = vmatpush1.xpose.msra.mxu0 %v368
    %615 = vmatprep.subr.mxu0 %v373
    %616 = vmatpush1.xpose.msra.mxu0 %v372
    %617 = vmatprep.subr.mxu0 %v377
    %618 = vmatpush1.xpose.msra.mxu0 %v376
    %619 = vmatprep.subr.mxu0 %v381
    %620 = vmatpush1.xpose.msra.mxu0 %v380
    %621 = vmatprep.subr.mxu0 %v385
    %622 = vmatpush1.xpose.msra.mxu0 %v384
    %623 = vmatprep.subr.mxu0 %v389
    %624 = vmatpush1.xpose.msra.mxu0 %v388
    %625 = vmatprep.subr.mxu0 %v393
    %626 = vmatpush1.xpose.msra.mxu0 %v392
    %627 = vmatprep.subr.mxu0 %v397
    %628 = vmatpush1.xpose.msra.mxu0 %v396
    %629 = vmatprep.subr.mxu0 %v401
    %630 = vmatpush1.xpose.msra.mxu0 %v400
    %631 = vmatprep.subr.mxu0 %v405
    %632 = vmatpush1.xpose.msra.mxu0 %v404
    %633 = vmatprep.subr.mxu0 %v409
    %634 = vmatpush1.xpose.msra.mxu0 %v408
    %635 = vmatprep.subr.mxu0 %v413
    %636 = vmatpush1.xpose.msra.mxu0 %v412
    %637 = vmatprep.subr.mxu0 %v417
    %638 = vmatpush1.xpose.msra.mxu0 %v416
    %639 = vmatprep.subr.mxu0 %v421
    %640 = vmatpush1.xpose.msra.mxu0 %v420
    %641 = vmatprep.mubr.f32.mxu0 %v495
    %642 = vmatmul.mubr.f32.gmra.mrb[0].mxu0 %v494
    %v643 = vpop.f32.mrb[0].mxu0
    %v644 = vadd.f32 %v567, %v643
    %v645 = vpop.f32.mrb[0].mxu0
    %v646 = vadd.f32 %v569, %v645
    %647 = vmatprep.mubr.f32.mxu0 %v499
    %648 = vmatmul.mubr.f32.gmra.mrb[0].mxu0 %v498
    %v649 = vpop.f32.mrb[0].mxu0
    %v650 = vadd.f32 %v573, %v649
    %v651 = vpop.f32.mrb[0].mxu0
    %v652 = vadd.f32 %v575, %v651
    %653 = vdwg.mxu0
    %654 = vmatprep.subr.mxu0 %v423
    %655 = vmatpush1.xpose.msra.mxu0 %v422
    %656 = vmatprep.subr.mxu0 %v427
    %657 = vmatpush1.xpose.msra.mxu0 %v426
    %658 = vmatprep.subr.mxu0 %v431
    %659 = vmatpush1.xpose.msra.mxu0 %v430
    %660 = vmatprep.subr.mxu0 %v435
    %661 = vmatpush1.xpose.msra.mxu0 %v434
    %662 = vmatprep.subr.mxu0 %v439
    %663 = vmatpush1.xpose.msra.mxu0 %v438
    %664 = vmatprep.subr.mxu0 %v443
    %665 = vmatpush1.xpose.msra.mxu0 %v442
    %666 = vmatprep.subr.mxu0 %v447
    %667 = vmatpush1.xpose.msra.mxu0 %v446
    %668 = vmatprep.subr.mxu0 %v451
    %669 = vmatpush1.xpose.msra.mxu0 %v450
    %670 = vmatprep.subr.mxu0 %v455
    %671 = vmatpush1.xpose.msra.mxu0 %v454
    %672 = vmatprep.subr.mxu0 %v459
    %673 = vmatpush1.xpose.msra.mxu0 %v458
    %674 = vmatprep.subr.mxu0 %v463
    %675 = vmatpush1.xpose.msra.mxu0 %v462
    %676 = vmatprep.subr.mxu0 %v467
    %677 = vmatpush1.xpose.msra.mxu0 %v466
    %678 = vmatprep.subr.mxu0 %v471
    %679 = vmatpush1.xpose.msra.mxu0 %v470
    %680 = vmatprep.subr.mxu0 %v475
    %681 = vmatpush1.xpose.msra.mxu0 %v474
    %682 = vmatprep.subr.mxu0 %v479
    %683 = vmatpush1.xpose.msra.mxu0 %v478
    %684 = vmatprep.subr.mxu0 %v483
    %685 = vmatpush1.xpose.msra.mxu0 %v482
    %686 = vmatprep.subr.mxu0 0.0
    %687 = vmatpush1.xpose.msra.mxu0 0.0
    %688 = vmatprep.subr.mxu0 0.0
    %689 = vmatpush1.xpose.msra.mxu0 0.0
    %690 = vmatprep.subr.mxu0 0.0
    %691 = vmatpush1.xpose.msra.mxu0 0.0
    %692 = vmatprep.subr.mxu0 0.0
    %693 = vmatpush1.xpose.msra.mxu0 0.0
    %694 = vmatprep.subr.mxu0 0.0
    %695 = vmatpush1.xpose.msra.mxu0 0.0
    %696 = vmatprep.subr.mxu0 0.0
    %697 = vmatpush1.xpose.msra.mxu0 0.0
    %698 = vmatprep.subr.mxu0 0.0
    %699 = vmatpush1.xpose.msra.mxu0 0.0
    %700 = vmatprep.subr.mxu0 0.0
    %701 = vmatpush1.xpose.msra.mxu0 0.0
    %702 = vmatprep.subr.mxu0 0.0
    %703 = vmatpush1.xpose.msra.mxu0 0.0
    %704 = vmatprep.subr.mxu0 0.0
    %705 = vmatpush1.xpose.msra.mxu0 0.0
    %706 = vmatprep.subr.mxu0 0.0
    %707 = vmatpush1.xpose.msra.mxu0 0.0
    %708 = vmatprep.subr.mxu0 0.0
    %709 = vmatpush1.xpose.msra.mxu0 0.0
    %710 = vmatprep.subr.mxu0 0.0
    %711 = vmatpush1.xpose.msra.mxu0 0.0
    %712 = vmatprep.subr.mxu0 0.0
    %713 = vmatpush1.xpose.msra.mxu0 0.0
    %714 = vmatprep.subr.mxu0 0.0
    %715 = vmatpush1.xpose.msra.mxu0 0.0
    %716 = vmatprep.subr.mxu0 0.0
    %717 = vmatpush1.xpose.msra.mxu0 0.0
    %718 = vmatprep.mubr.f32.mxu0 %v493
    %719 = vmatmul.mubr.f32.gmra.mrb[0].mxu0 %v492
    %v720 = vpop.f32.mrb[0].mxu0
    %v721 = vadd.f32 0.0, %v720
    %v722 = vpop.f32.mrb[0].mxu0
    %723 = vmatprep.mubr.f32.mxu0 %v497
    %724 = vmatmul.mubr.f32.gmra.mrb[0].mxu0 %v496
    %v725 = vpop.f32.mrb[0].mxu0
    %v726 = vadd.f32 0.0, %v725
    %v727 = vpop.f32.mrb[0].mxu0
    %728 = vdwg.mxu0
    %729 = vmatprep.subr.mxu0 %v425
    %730 = vmatpush1.xpose.msra.mxu0 %v424
    %731 = vmatprep.subr.mxu0 %v429
    %732 = vmatpush1.xpose.msra.mxu0 %v428
    %733 = vmatprep.subr.mxu0 %v433
    %734 = vmatpush1.xpose.msra.mxu0 %v432
    %735 = vmatprep.subr.mxu0 %v437
    %736 = vmatpush1.xpose.msra.mxu0 %v436
    %737 = vmatprep.subr.mxu0 %v441
    %738 = vmatpush1.xpose.msra.mxu0 %v440
    %739 = vmatprep.subr.mxu0 %v445
    %740 = vmatpush1.xpose.msra.mxu0 %v444
    %741 = vmatprep.subr.mxu0 %v449
    %742 = vmatpush1.xpose.msra.mxu0 %v448
    %743 = vmatprep.subr.mxu0 %v453
    %744 = vmatpush1.xpose.msra.mxu0 %v452
    %745 = vmatprep.subr.mxu0 %v457
    %746 = vmatpush1.xpose.msra.mxu0 %v456
    %747 = vmatprep.subr.mxu0 %v461
    %748 = vmatpush1.xpose.msra.mxu0 %v460
    %749 = vmatprep.subr.mxu0 %v465
    %750 = vmatpush1.xpose.msra.mxu0 %v464
    %751 = vmatprep.subr.mxu0 %v469
    %752 = vmatpush1.xpose.msra.mxu0 %v468
    %753 = vmatprep.subr.mxu0 %v473
    %754 = vmatpush1.xpose.msra.mxu0 %v472
    %755 = vmatprep.subr.mxu0 %v477
    %756 = vmatpush1.xpose.msra.mxu0 %v476
    %757 = vmatprep.subr.mxu0 %v481
    %758 = vmatpush1.xpose.msra.mxu0 %v480
    %759 = vmatprep.subr.mxu0 %v485
    %760 = vmatpush1.xpose.msra.mxu0 %v484
    %761 = vmatprep.subr.mxu0 0.0
    %762 = vmatpush1.xpose.msra.mxu0 0.0
    %763 = vmatprep.subr.mxu0 0.0
    %764 = vmatpush1.xpose.msra.mxu0 0.0
    %765 = vmatprep.subr.mxu0 0.0
    %766 = vmatpush1.xpose.msra.mxu0 0.0
    %767 = vmatprep.subr.mxu0 0.0
    %768 = vmatpush1.xpose.msra.mxu0 0.0
    %769 = vmatprep.subr.mxu0 0.0
    %770 = vmatpush1.xpose.msra.mxu0 0.0
    %771 = vmatprep.subr.mxu0 0.0
    %772 = vmatpush1.xpose.msra.mxu0 0.0
    %773 = vmatprep.subr.mxu0 0.0
    %774 = vmatpush1.xpose.msra.mxu0 0.0
    %775 = vmatprep.subr.mxu0 0.0
    %776 = vmatpush1.xpose.msra.mxu0 0.0
    %777 = vmatprep.subr.mxu0 0.0
    %778 = vmatpush1.xpose.msra.mxu0 0.0
    %779 = vmatprep.subr.mxu0 0.0
    %780 = vmatpush1.xpose.msra.mxu0 0.0
    %781 = vmatprep.subr.mxu0 0.0
    %782 = vmatpush1.xpose.msra.mxu0 0.0
    %783 = vmatprep.subr.mxu0 0.0
    %784 = vmatpush1.xpose.msra.mxu0 0.0
    %785 = vmatprep.subr.mxu0 0.0
    %786 = vmatpush1.xpose.msra.mxu0 0.0
    %787 = vmatprep.subr.mxu0 0.0
    %788 = vmatpush1.xpose.msra.mxu0 0.0
    %789 = vmatprep.subr.mxu0 0.0
    %790 = vmatpush1.xpose.msra.mxu0 0.0
    %791 = vmatprep.subr.mxu0 0.0
    %792 = vmatpush1.xpose.msra.mxu0 0.0
    %793 = vmatprep.mubr.f32.mxu0 %v495
    %794 = vmatmul.mubr.f32.gmra.mrb[0].mxu0 %v494
    %v795 = vpop.f32.mrb[0].mxu0
    %v796 = vadd.f32 %v721, %v795
    %v797 = vpop.f32.mrb[0].mxu0
    %798 = vmatprep.mubr.f32.mxu0 %v499
    %799 = vmatmul.mubr.f32.gmra.mrb[0].mxu0 %v498
    %v800 = vpop.f32.mrb[0].mxu0
    %v801 = vadd.f32 %v726, %v800
    %v802 = vpop.f32.mrb[0].mxu0
    %803 = vdwg.mxu0
    %v804 = vadd.f32 %v486, %v644
    %v805 = vadd.f32 %v487, %v646
    %v806 = vadd.f32 %v488, %v796
    %v807 = vadd.f32 %v489, %v650
    %v808 = vadd.f32 %v490, %v652
    %v809 = vadd.f32 %v491, %v801
    %810 = vst [vmem:[#allocation2] sm:$0xff] %v804
    %811 = vst [vmem:[#allocation2 + $0x8] sm:$0xff] %v805
    %812 = vst [vmem:[#allocation2 + $0x10] sm:$0xff] %v806
    %813 = vst [vmem:[#allocation2 + $0x18] sm:$0xff] %v807
    %814 = vst [vmem:[#allocation2 + $0x20] sm:$0xff] %v808
    %815 = vst [vmem:[#allocation2 + $0x28] sm:$0xff] %v809
    // Predicated region
    $region38: #{linear_mask_forward.1} parent=1 // pred_check
      %p816 = pneg %p69
    $region39: #{linear_mask_forward.1} parent=1 // pred_check_branch
      %818 = sbr.rel (%p816) target = $region41
    $region40: #{linear_mask_forward.1} parent=1 // pred_region
      %v819 = vld [vmem:[#allocation2] sm:$0xff]
      %v820 = vld [vmem:[#allocation2 + $0x8] sm:$0xff]
      %v821 = vld [vmem:[#allocation2 + $0x10] sm:$0xff]
      %v822 = vld [vmem:[#allocation2 + $0x18] sm:$0xff]
      %v823 = vld [vmem:[#allocation2 + $0x20] sm:$0xff]
      %v824 = vld [vmem:[#allocation2 + $0x28] sm:$0xff]
      %v825 = vld [vmem:[#allocation9] sm:$0x7]
      %v827 = vlaneseq
      %v828 = vshrl.u32 %v827, 7
      %v829 = vsub.s32 0, %v828
      %v830 = vrot.slane %v825, %v829
      %v831 = vlaneseq
      %v832 = vshrl.u32 %v831, 7
      %v833 = vsub.s32 1, %v832
      %v834 = vrot.slane %v825, %v833
      %v835 = vlaneseq
      %v836 = vshrl.u32 %v835, 7
      %v837 = vsub.s32 2, %v836
      %v838 = vrot.slane %v825, %v837
      %v842 = vadd.f32 %v819, %v830
      %v843 = vadd.f32 %v820, %v834
      %v844 = vadd.f32 %v821, %v838
      %v845 = vadd.f32 %v822, %v830
      %v846 = vadd.f32 %v823, %v834
      %v847 = vadd.f32 %v824, %v838
      %848 = vst [vmem:[#allocation11] sm:$0xff] %v842
      %849 = vst [vmem:[#allocation11 + $0x8] sm:$0xff] %v843
      %850 = vst [vmem:[#allocation11 + $0x10] sm:$0xff] %v844
      %851 = vst [vmem:[#allocation11 + $0x18] sm:$0xff] %v845
      %852 = vst [vmem:[#allocation11 + $0x20] sm:$0xff] %v846
      %853 = vst [vmem:[#allocation11 + $0x28] sm:$0xff] %v847
    $region41: #{linear_mask_forward.1} parent=1 // pred_fallthru
      _
    // Predicated region
    $region42: #{linear_mask_forward.1} parent=1 // pred_check
      _
    $region43: #{linear_mask_forward.1} parent=1 // pred_check_branch
      %855 = sbr.rel (0) target = $region45
    $region44: #{linear_mask_forward.1} parent=1 // pred_region
      %s857 = ssub.s32 768, 768
      %858 = vsyncadd [#allocation5], %s857
      %s859 = sshll.u32 [#allocation11], 4
      %s860 = int_to_ptr.vmem [resolvable:$true] %s859
      %865 = dma.vmem_to_hbm [thread:$0]  %s860, 768, %s4, [#allocation5], 384, 384, 24
    $region45: #{linear_mask_forward.1} parent=1 // pred_fallthru
      _
    // Predicated region
    $region46: #{linear_mask_forward.1} parent=1 // pred_check
      _
    $region47: #{linear_mask_forward.1} parent=1 // pred_check_branch
      %867 = sbr.rel (0) target = $region49
    $region48: #{linear_mask_forward.1} parent=1 // pred_region
      %868 = dma.done [#allocation5], 768
    $region49: #{linear_mask_forward.1} parent=1 // pred_fallthru
      _
    %869 = vsyncpa [#allocation4], 1
    %870 = vsyncpa [#allocation7], 1
    %871 = vsyncpa [#allocation10], 1
    %872 = vsyncpa [#allocation5], 1

</llo_original>
